<compile_context>
chip_gen: v7x
topology: tpu7x:2x2x1
jax: 0.10.0
libtpu: 0.0.40
codegen_flags: <defaults>
</compile_context>

<pallas_src>
import math
import functools

import jax
import jax.numpy as jnp
from jax import lax
from jax.experimental import pallas as pl
from jax.experimental.pallas import tpu as pltpu


def _round_up(x, m):
    return ((x + m - 1) // m) * m


def _mxu_pad(x):
    # <=128 -> 128 (native v5e MXU shape, minimal padding elsewhere);
    # >128  -> multiple of 256 so the 256-wide v6e/v7x MXU fills.
    return 128 if x <= 128 else _round_up(x, 256)


def _reverse_diffusion_kernel(z_ref, mask_ref, mu_ref, table_ref,
                              w1x_ref, w1c_ref, w2_ref, b2_ref,
                              o_ref, cond_ref, *, n_timesteps, cos_h, sin_h):
    # ---- Loop-invariant conditioning matmul --------------------------------
    # Computed once, parked in VMEM scratch (not vregs) so the time loop stays
    # register-light.  b1 is folded into the time-embedding table.
    cond_ref[...] = jnp.dot(mu_ref[...], w1c_ref[...],
                            preferred_element_type=jnp.float32)    # (TR, Dp)

    def step(i, xt):
        # Precomputed sinusoidal embedding row for diffusion step i (+ b1).
        t_emb = table_ref[pl.ds(i, 1), :]                          # (1, Dp)

        # estimator: position-wise MLP conditioned on mu + diffusion step.
        # Weight tiles are read from their resident VMEM refs at the dot call
        # so the loads pipeline under the MXU instead of occupying registers
        # across the whole loop.
        h1 = jnp.dot(xt.astype(jnp.bfloat16), w1x_ref[...],
                     preferred_element_type=jnp.float32)           # (TR, Dp)
        hidden = jnp.tanh(h1 + cond_ref[...] + t_emb)              # (TR, Dp)
        v_predict = (jnp.dot(hidden.astype(jnp.bfloat16), w2_ref[...],
                             preferred_element_type=jnp.float32)
                     + b2_ref[...]) * mask_ref[...]                # (TR, Fp)

        # velocity update: xt = cos(0.5*pi*h)*xt - sin(0.5*pi*h)*v_predict
        return cos_h * xt - sin_h * v_predict

    xt = lax.fori_loop(0, n_timesteps, step, z_ref[...])
    o_ref[...] = xt.astype(o_ref.dtype)


def reverse_diffusion(z, x_mask, mu, n_timesteps, params, *, dim, pe_scale=1000):
    """z, mu: (B, n_feats, T) float32; x_mask: (B, 1, T) float32."""
    B, F, T = z.shape
    R = B * T
    n_timesteps = int(n_timesteps)
    w1x, w1c, b1, w2, b2 = params

    # ---- Lane-dense padded sizes + row tiling -------------------------------
    F_pad = _mxu_pad(F)
    D_pad = _mxu_pad(dim)

    # Row tile: cap at 128 rows (register pressure), aim for >= 2 tiles so
    # both v7x TensorCores get work on the "parallel" axis.
    tile_r = max(8, min(128, _round_up((R + 1) // 2, 8)))
    R_pad = _round_up(R, tile_r)
    n_tiles = R_pad // tile_r

    # NCT -> (B*T, F) / (B*T, 1), zero-padded to lane-dense shapes.
    z2 = jnp.transpose(z, (0, 2, 1)).reshape(R, F)
    mu2 = jnp.transpose(mu, (0, 2, 1)).reshape(R, F)
    mask2 = jnp.transpose(x_mask, (0, 2, 1)).reshape(R, 1)

    z2 = jnp.pad(z2, ((0, R_pad - R), (0, F_pad - F)))
    mu2 = jnp.pad(mu2, ((0, R_pad - R), (0, F_pad - F))).astype(jnp.bfloat16)
    mask2 = jnp.pad(mask2, ((0, R_pad - R), (0, 0)))

    w1x_p = jnp.pad(w1x, ((0, F_pad - F), (0, D_pad - dim))).astype(jnp.bfloat16)
    w1c_p = jnp.pad(w1c, ((0, F_pad - F), (0, D_pad - dim))).astype(jnp.bfloat16)
    w2_p = jnp.pad(w2, ((0, D_pad - dim), (0, F_pad - F))).astype(jnp.bfloat16)
    b2_p = jnp.pad(b2, ((0, 0), (0, F_pad - F)))

    # ---- Precompute the diffusion-step embedding table (b1 folded in) ------
    t_min = 1e-05
    t_max = 1.0 - 1e-05
    h = (t_max - t_min) / n_timesteps
    steps = jnp.arange(n_timesteps, dtype=jnp.float32)
    t_vals = t_max - steps * h                                   # (n,)
    half = dim // 2
    inv_freq = jnp.exp(-math.log(10000.0)
                       * jnp.arange(half, dtype=jnp.float32) / float(half))
    arg = (t_vals[:, None] * float(pe_scale)) * inv_freq[None, :]
    t_emb = jnp.concatenate([jnp.sin(arg), jnp.cos(arg)], axis=-1)  # (n, dim)
    table = jnp.pad(t_emb + b1, ((0, 0), (0, D_pad - dim)))         # (n, D_pad)

    cos_h = math.cos(0.5 * math.pi * h)
    sin_h = math.sin(0.5 * math.pi * h)

    kernel = functools.partial(_reverse_diffusion_kernel,
                               n_timesteps=n_timesteps,
                               cos_h=float(cos_h),
                               sin_h=float(sin_h))

    # ---- Cost hint: kernel does n_timesteps x more FLOPs than byte traffic --
    flops = int(2 * R_pad * F_pad * D_pad * (1 + 2 * n_timesteps))
    transcendentals = int(n_timesteps * R_pad * D_pad)
    bytes_accessed = int(
        4 * (R_pad * F_pad)            # z in (f32)
        + 2 * (R_pad * F_pad)          # mu in (bf16)
        + 4 * R_pad                    # mask
        + 2 * (2 * F_pad * D_pad + D_pad * F_pad)  # weights (bf16)
        + 4 * (n_timesteps * D_pad + F_pad)        # table + b2
        + 4 * (R_pad * F_pad))         # out
    cost = pl.CostEstimate(flops=flops,
                           transcendentals=transcendentals,
                           bytes_accessed=bytes_accessed)

    def row_spec(lanes):
        return pl.BlockSpec((tile_r, lanes), lambda r: (r, 0))

    def const_spec(shape):
        # NOTE: these blocks are revisited with the same index every grid step
        # so they stay resident; their double-buffered VMEM footprint is tiny
        # at these sizes (pipeline_mode=pl.Buffered(1) only becomes worth it
        # for very large f32 tables on v7x's 64 MiB VMEM).
        return pl.BlockSpec(shape, lambda r: (0, 0))

    out2 = pl.pallas_call(
        kernel,
        out_shape=jax.ShapeDtypeStruct((R_pad, F_pad), jnp.float32),
        grid=(n_tiles,),
        in_specs=[
            row_spec(F_pad),                    # z
            row_spec(1),                        # mask
            row_spec(F_pad),                    # mu
            const_spec((n_timesteps, D_pad)),   # time-embedding table (+b1)
            const_spec((F_pad, D_pad)),         # w1x
            const_spec((F_pad, D_pad)),         # w1c
            const_spec((D_pad, F_pad)),         # w2
            const_spec((1, F_pad)),             # b2
        ],
        out_specs=row_spec(F_pad),
        scratch_shapes=[pltpu.VMEM((tile_r, D_pad), jnp.float32)],  # cond
        compiler_params=pltpu.CompilerParams(
            dimension_semantics=("parallel",)),
        cost_estimate=cost,
    )(z2, mask2, mu2, table, w1x_p, w1c_p, w2_p, b2_p)

    # (R_pad, F_pad) -> (B, n_feats, T)
    out2 = out2[:R, :F]
    return jnp.transpose(out2.reshape(B, T, F), (0, 2, 1))


def init_estimator_params(key, n_feats, dim):
    k1, k2, k3 = jax.random.split(key, 3)
    w1x = (jax.random.normal(k1, (n_feats, dim), jnp.float32)
           / math.sqrt(n_feats))
    w1c = (jax.random.normal(k2, (n_feats, dim), jnp.float32)
           / math.sqrt(n_feats))
    b1 = jnp.zeros((1, dim), jnp.float32)
    w2 = (jax.random.normal(k3, (dim, n_feats), jnp.float32)
          / math.sqrt(dim))
    b2 = jnp.zeros((1, n_feats), jnp.float32)
    return (w1x, w1c, b1, w2, b2)


if __name__ == "__main__":
    # Small shapes consistent with the module: batch=2, n_feats=16, frames T=16
    B, n_feats, T = 2, 16, 16
    dim = 32
    n_timesteps = 4
    pe_scale = 1000

    key = jax.random.PRNGKey(0)
    kz, kmu, kp = jax.random.split(key, 3)

    z = jax.random.normal(kz, (B, n_feats, T), jnp.float32)      # latent noise
    mu = jax.random.normal(kmu, (B, n_feats, T), jnp.float32)    # condition
    # mask: first 12 frames valid in batch 0, all 16 in batch 1
    lens = jnp.array([12, 16])
    x_mask = (jnp.arange(T)[None, None, :] < lens[:, None, None]).astype(jnp.float32)

    params = init_estimator_params(kp, n_feats, dim)

    out = reverse_diffusion(z, x_mask, mu, n_timesteps, params,
                            dim=dim, pe_scale=pe_scale)
    jax.block_until_ready(out)
    assert out.shape == (B, n_feats, T) and out.dtype == jnp.float32
    assert bool(jnp.all(jnp.isfinite(out)))
    print("KERNEL_OK")
</pallas_src>

<mosaic_0001>
module attributes {stable_mosaic.version = 11 : i64} {
  func.func @_reverse_diffusion_kernel(%arg0: i32, %arg1: memref<16x128xf32, #tpu.memory_space<vmem>>, %arg2: memref<16x1xf32, #tpu.memory_space<vmem>>, %arg3: memref<16x128xbf16, #tpu.memory_space<vmem>>, %arg4: memref<4x128xf32, #tpu.memory_space<vmem>>, %arg5: memref<128x128xbf16, #tpu.memory_space<vmem>>, %arg6: memref<128x128xbf16, #tpu.memory_space<vmem>>, %arg7: memref<128x128xbf16, #tpu.memory_space<vmem>>, %arg8: memref<1x128xf32, #tpu.memory_space<vmem>>, %arg9: memref<16x128xf32, #tpu.memory_space<vmem>>, %arg10: memref<16x128xf32, #tpu.memory_space<vmem>>) attributes {dimension_semantics = [#tpu.dimension_semantics<parallel>], iteration_bounds = array<i64: 2>, scalar_prefetch = 0 : i64, scratch_operands = 1 : i64, tpu.core_type = #tpu.core_type<tc>, window_params = [{transform_indices = @transform_0, window_bounds = array<i64: 16, 128>}, {transform_indices = @transform_1, window_bounds = array<i64: 16, 1>}, {transform_indices = @transform_2, window_bounds = array<i64: 16, 128>}, {pipeline_mode = #tpu.pipeline_mode<synchronous>, transform_indices = @transform_3, window_bounds = array<i64: 4, 128>}, {pipeline_mode = #tpu.pipeline_mode<synchronous>, transform_indices = @transform_4, window_bounds = array<i64: 128, 128>}, {pipeline_mode = #tpu.pipeline_mode<synchronous>, transform_indices = @transform_5, window_bounds = array<i64: 128, 128>}, {pipeline_mode = #tpu.pipeline_mode<synchronous>, transform_indices = @transform_6, window_bounds = array<i64: 128, 128>}, {pipeline_mode = #tpu.pipeline_mode<synchronous>, transform_indices = @transform_7, window_bounds = array<i64: 1, 128>}, {transform_indices = @transform_8, window_bounds = array<i64: 16, 128>}]} {
    %c0 = arith.constant 0 : index
    %c0_0 = arith.constant 0 : index
    %0 = vector.load %arg3[%c0, %c0_0] : memref<16x128xbf16, #tpu.memory_space<vmem>>, vector<16x128xbf16>
    %c0_1 = arith.constant 0 : index
    %c0_2 = arith.constant 0 : index
    %1 = vector.load %arg6[%c0_1, %c0_2] : memref<128x128xbf16, #tpu.memory_space<vmem>>, vector<128x128xbf16>
    %cst = arith.constant dense<0.000000e+00> : vector<16x128xf32>
    %2 = tpu.matmul %0, %1, %cst {dimension_numbers = #tpu.dot_dimension_numbers<[1], [0], [0], [1], [0, 0, 1, 1], [], []>} : vector<16x128xbf16>, vector<128x128xbf16>, vector<16x128xf32> -> vector<16x128xf32>
    %c0_3 = arith.constant 0 : index
    %c0_4 = arith.constant 0 : index
    %3 = vector.load %arg10[%c0_3, %c0_4] : memref<16x128xf32, #tpu.memory_space<vmem>>, vector<16x128xf32>
    tpu.vector_store %arg10[%c0_3, %c0_4], %2 {strides = array<i32>} : memref<16x128xf32, #tpu.memory_space<vmem>>, vector<16x128xf32>,
    %c0_5 = arith.constant 0 : index
    %c0_6 = arith.constant 0 : index
    %4 = vector.load %arg1[%c0_5, %c0_6] : memref<16x128xf32, #tpu.memory_space<vmem>>, vector<16x128xf32>
    %c0_i32 = arith.constant 0 : i32
    %c4_i32 = arith.constant 4 : i32
    %5 = arith.addi %c0_i32, %c4_i32 : i32
    %c1_i32 = arith.constant 1 : i32
    %6 = scf.for %arg11 = %c0_i32 to %5 step %c1_i32 iter_args(%arg12 = %4) -> (vector<16x128xf32>)  : i32 {
      %8 = arith.index_cast %arg11 : i32 to index
      %c0_10 = arith.constant 0 : index
      %9 = vector.load %arg4[%8, %c0_10] : memref<4x128xf32, #tpu.memory_space<vmem>>, vector<1x128xf32>
      %10 = arith.truncf %arg12 : vector<16x128xf32> to vector<16x128xbf16>
      %c0_11 = arith.constant 0 : index
      %c0_12 = arith.constant 0 : index
      %11 = vector.load %arg5[%c0_11, %c0_12] : memref<128x128xbf16, #tpu.memory_space<vmem>>, vector<128x128xbf16>
      %cst_13 = arith.constant dense<0.000000e+00> : vector<16x128xf32>
      %12 = tpu.matmul %10, %11, %cst_13 {dimension_numbers = #tpu.dot_dimension_numbers<[1], [0], [0], [1], [0, 0, 1, 1], [], []>} : vector<16x128xbf16>, vector<128x128xbf16>, vector<16x128xf32> -> vector<16x128xf32>
      %c0_14 = arith.constant 0 : index
      %c0_15 = arith.constant 0 : index
      %13 = vector.load %arg10[%c0_14, %c0_15] : memref<16x128xf32, #tpu.memory_space<vmem>>, vector<16x128xf32>
      %14 = arith.addf %12, %13 : vector<16x128xf32>
      %15 = vector.broadcast %9 : vector<1x128xf32> to vector<16x128xf32>
      %16 = arith.addf %14, %15 : vector<16x128xf32>
      %17 = math.tanh %16 : vector<16x128xf32>
      %18 = arith.truncf %17 : vector<16x128xf32> to vector<16x128xbf16>
      %c0_16 = arith.constant 0 : index
      %c0_17 = arith.constant 0 : index
      %19 = vector.load %arg7[%c0_16, %c0_17] : memref<128x128xbf16, #tpu.memory_space<vmem>>, vector<128x128xbf16>
      %cst_18 = arith.constant dense<0.000000e+00> : vector<16x128xf32>
      %20 = tpu.matmul %18, %19, %cst_18 {dimension_numbers = #tpu.dot_dimension_numbers<[1], [0], [0], [1], [0, 0, 1, 1], [], []>} : vector<16x128xbf16>, vector<128x128xbf16>, vector<16x128xf32> -> vector<16x128xf32>
      %c0_19 = arith.constant 0 : index
      %c0_20 = arith.constant 0 : index
      %21 = vector.load %arg8[%c0_19, %c0_20] : memref<1x128xf32, #tpu.memory_space<vmem>>, vector<1x128xf32>
      %22 = vector.broadcast %21 : vector<1x128xf32> to vector<16x128xf32>
      %23 = arith.addf %20, %22 : vector<16x128xf32>
      %c0_21 = arith.constant 0 : index
      %c0_22 = arith.constant 0 : index
      %24 = vector.load %arg2[%c0_21, %c0_22] : memref<16x1xf32, #tpu.memory_space<vmem>>, vector<16x1xf32>
      %25 = vector.broadcast %24 : vector<16x1xf32> to vector<16x128xf32>
      %26 = arith.mulf %23, %25 : vector<16x128xf32>
      %cst_23 = arith.constant 0.923882544 : f32
      %27 = vector.broadcast %cst_23 : f32 to vector<16x128xf32>
      %28 = arith.mulf %27, %arg12 : vector<16x128xf32>
      %cst_24 = arith.constant 0.382676184 : f32
      %29 = vector.broadcast %cst_24 : f32 to vector<16x128xf32>
      %30 = arith.mulf %29, %26 : vector<16x128xf32>
      %31 = arith.subf %28, %30 : vector<16x128xf32>
      scf.yield %31 : vector<16x128xf32>
    }
    %c4_i32_7 = arith.constant 4 : i32
    %c0_8 = arith.constant 0 : index
    %c0_9 = arith.constant 0 : index
    %7 = vector.load %arg9[%c0_8, %c0_9] : memref<16x128xf32, #tpu.memory_space<vmem>>, vector<16x128xf32>
    tpu.vector_store %arg9[%c0_8, %c0_9], %6 {strides = array<i32>} : memref<16x128xf32, #tpu.memory_space<vmem>>, vector<16x128xf32>,
    return
  }
  func.func @transform_0(%arg0: i32) -> (i32, i32) {
    %c0_i32 = arith.constant 0 : i32
    %c0_i32_0 = arith.constant 0 : i32
    return %arg0, %c0_i32 : i32, i32
  }
  func.func @transform_1(%arg0: i32) -> (i32, i32) {
    %c0_i32 = arith.constant 0 : i32
    %c0_i32_0 = arith.constant 0 : i32
    return %arg0, %c0_i32 : i32, i32
  }
  func.func @transform_2(%arg0: i32) -> (i32, i32) {
    %c0_i32 = arith.constant 0 : i32
    %c0_i32_0 = arith.constant 0 : i32
    return %arg0, %c0_i32 : i32, i32
  }
  func.func @transform_3(%arg0: i32) -> (i32, i32) {
    %c0_i32 = arith.constant 0 : i32
    %c0_i32_0 = arith.constant 0 : i32
    %c0_i32_1 = arith.constant 0 : i32
    return %c0_i32, %c0_i32_0 : i32, i32
  }
  func.func @transform_4(%arg0: i32) -> (i32, i32) {
    %c0_i32 = arith.constant 0 : i32
    %c0_i32_0 = arith.constant 0 : i32
    %c0_i32_1 = arith.constant 0 : i32
    return %c0_i32, %c0_i32_0 : i32, i32
  }
  func.func @transform_5(%arg0: i32) -> (i32, i32) {
    %c0_i32 = arith.constant 0 : i32
    %c0_i32_0 = arith.constant 0 : i32
    %c0_i32_1 = arith.constant 0 : i32
    return %c0_i32, %c0_i32_0 : i32, i32
  }
  func.func @transform_6(%arg0: i32) -> (i32, i32) {
    %c0_i32 = arith.constant 0 : i32
    %c0_i32_0 = arith.constant 0 : i32
    %c0_i32_1 = arith.constant 0 : i32
    return %c0_i32, %c0_i32_0 : i32, i32
  }
  func.func @transform_7(%arg0: i32) -> (i32, i32) {
    %c0_i32 = arith.constant 0 : i32
    %c0_i32_0 = arith.constant 0 : i32
    %c0_i32_1 = arith.constant 0 : i32
    return %c0_i32, %c0_i32_0 : i32, i32
  }
  func.func @transform_8(%arg0: i32) -> (i32, i32) {
    %c0_i32 = arith.constant 0 : i32
    %c0_i32_0 = arith.constant 0 : i32
    return %arg0, %c0_i32 : i32, i32
  }
}

</mosaic_0001>

<llo_original>
// kernel: tpu_custom_call.1
$region0: #{tpu_custom_call.1}
  #allocation0 [shape = 'u32[]', space=smem, size = 0x4, offset = 0x4, fixed_abs, tag = 'smem constant byte address 0x4 - core index']
  #allocation1 [shape = 'u32[144,128]{1,0:T(1,128)}', space=vmem, size = 0x12000, scoped, tag = 'internal scratch']
  #allocation2 [shape = 'f32[16,128]{1,0:T(8,128)}', space=vmem, size = 0x2000, scoped, tag = 'scratch operand']
  %s0 = inlined_call_operand.vmem [shape: f32[32,128], index: 0, kind: input, shape index: {}]
  %s1 = inlined_call_operand.vmem [shape: f32[32,1], index: 1, kind: input, shape index: {}]
  %s2 = inlined_call_operand.hbm [shape: bf16[32,128], index: 2, kind: input, shape index: {}]
  %s3 = inlined_call_operand.vmem [shape: f32[4,128], index: 3, kind: input, shape index: {}]
  %s4 = inlined_call_operand.hbm [shape: bf16[128,128], index: 4, kind: input, shape index: {}]
  %s5 = inlined_call_operand.hbm [shape: bf16[128,128], index: 5, kind: input, shape index: {}]
  %s6 = inlined_call_operand.hbm [shape: bf16[128,128], index: 6, kind: input, shape index: {}]
  %s7 = inlined_call_operand.vmem [shape: f32[1,128], index: 7, kind: input, shape index: {}]
  %s8 = inlined_call_operand.hbm [shape: f32[32,128], index: 8, kind: output, shape index: {}]
  %s9 = sld [smem:[#allocation0]]
  $region88: #{tpu_custom_call.1} parent=0
    _
  %s11 = ssub.s32 1, %s9
  %s12 = scalar_select 0, %s11, %s9
  $region1: #{tpu_custom_call.1} parent=0
    #allocation3 [shape = 'u8[8192]{0}', space=vmem, size = 0x2000, scoped, tag = 'input window, operand 2']
    #allocation4 [shape = 's32[2]{0}', space=sflag, size = 0x8, scoped, tag = 'scoped memory for tpu_custom_call.1']
    #allocation5 [shape = 's32[2]{0}', space=sflag, size = 0x8, scoped, tag = 'scoped memory for tpu_custom_call.1']
    #allocation6 [shape = 'u8[32768]{0}', space=vmem, size = 0x8000, scoped, tag = 'input window, operand 4, single buffered']
    #allocation7 [shape = 's32[1]{0}', space=sflag, size = 0x4, scoped, tag = 'scoped memory for tpu_custom_call.1']
    #allocation8 [shape = 'u8[32768]{0}', space=vmem, size = 0x8000, scoped, tag = 'input window, operand 5, single buffered']
    #allocation9 [shape = 'u8[32768]{0}', space=vmem, size = 0x8000, scoped, tag = 'input window, operand 6, single buffered']
    #allocation10 [shape = 's32[1]{0}', space=sflag, size = 0x4, scoped, tag = 'scoped memory for tpu_custom_call.1']
    #allocation11 [shape = 'u8[16384]{0}', space=vmem, size = 0x4000, scoped, tag = 'output window, operand 0']
    %13 = vsyncpa [#allocation4], 0
    %s14 = scalar_lea.sflag [#allocation4], 1
    %15 = vsyncpa %s14, 0
    %16 = vsyncpa [#allocation7], 0
    %17 = vsyncpa [#allocation10], 0
    %18 = vsyncpa [#allocation5], 0
    %s19 = scalar_lea.sflag [#allocation5], 1
    %20 = vsyncpa %s19, 0
    loop: start=0, step=1, limit=4
    $region2: #{tpu_custom_call.1} parent=1 // loop_pre_header
      _
    $region3: #{tpu_custom_call.1} parent=1 // loop_header
      %s22 = sphi 0, %s26
      %p23 = scmp.ge.s32.totalorder %s22, 4
      %s32 = sphi 0, %s34
      %s35 = sphi 0, %s32
      %s36 = sphi 0, %s35
      %s52 = sphi 0, %s36
      %s58 = sphi 0, %s60
      %s61 = sphi 0, %s58
      %s62 = sphi 0, %s61
      %s78 = sphi 0, %s62
      %s84 = sphi 0, %s86
      %s87 = sphi 0, %s84
      %s88 = sphi 0, %s87
      %s104 = sphi 0, %s88
      %s108 = sphi 0, %s108
      %s110 = sphi 0, %s108
      %s111 = sphi 0, %s110
      %s125 = sphi 0, %s111
      %s129 = sphi 0, %s129
      %s131 = sphi 0, %s129
      %s132 = sphi 0, %s131
      %s146 = sphi 0, %s132
      %s150 = sphi 0, %s150
      %s152 = sphi 0, %s150
      %s153 = sphi 0, %s152
      %s167 = sphi 0, %s153
      %s171 = sphi 0, %s171
      %s173 = sphi 0, %s171
      %s174 = sphi 0, %s173
      %s188 = sphi 0, %s174
      %s192 = sphi 0, %s192
      %s194 = sphi 0, %s192
      %s195 = sphi 0, %s194
      %s209 = sphi 0, %s195
      %s215 = sphi 0, %s217
      %s218 = sphi 0, %s215
      %s219 = sphi 0, %s218
      %s235 = sphi 0, %s219
    $region4: #{tpu_custom_call.1} parent=1 // loop_header_branch
      %25 = sbr.rel (%p23) target = $region8
    $region5: #{tpu_custom_call.1} parent=1 // loop_body
      %s27 = ssub.s32 %s22, 1
      %s28 = ssub.s32 %s22, 2
      %s29 = sadd.s32 %s22, 1
      %s30 = ssub.s32 %s22, %s29
      %p31 = scmp.eq.s32.totalorder %s30, 0
      %s33 = sadd.s32 %s32, 1
      %s34 = scalar_select %p31, %s32, %s33
      %p37 = pneg %p31
      %p38 = scmp.eq.s32.totalorder %s22, 1
      %p39 = por %p37, %p38
      %p40 = scmp.ne.s32.totalorder %s32, %s35
      %p41 = scmp.eq.s32.totalorder %s22, 0
      %p42 = por %p40, %p41
      %p43 = scmp.ne.s32.totalorder %s32, %s35
      %p44 = scmp.eq.s32.totalorder %s27, 1
      %p45 = por %p43, %p44
      %p46 = scmp.ne.s32.totalorder %s35, %s36
      %p47 = scmp.eq.s32.totalorder %s27, 0
      %p48 = por %p46, %p47
      %p49 = scmp.ne.s32.totalorder %s35, %s36
      %p50 = scmp.eq.s32.totalorder %s28, 1
      %p51 = por %p49, %p50
      %p53 = scmp.ne.s32.totalorder %s36, %s52
      %p54 = scmp.eq.s32.totalorder %s28, 0
      %p55 = por %p53, %p54
      %s56 = ssub.s32 %s22, %s29
      %p57 = scmp.eq.s32.totalorder %s56, 0
      %s59 = sadd.s32 %s58, 1
      %s60 = scalar_select %p57, %s58, %s59
      %p63 = pneg %p57
      %p64 = scmp.eq.s32.totalorder %s22, 1
      %p65 = por %p63, %p64
      %p66 = scmp.ne.s32.totalorder %s58, %s61
      %p67 = scmp.eq.s32.totalorder %s22, 0
      %p68 = por %p66, %p67
      %p69 = scmp.ne.s32.totalorder %s58, %s61
      %p70 = scmp.eq.s32.totalorder %s27, 1
      %p71 = por %p69, %p70
      %p72 = scmp.ne.s32.totalorder %s61, %s62
      %p73 = scmp.eq.s32.totalorder %s27, 0
      %p74 = por %p72, %p73
      %p75 = scmp.ne.s32.totalorder %s61, %s62
      %p76 = scmp.eq.s32.totalorder %s28, 1
      %p77 = por %p75, %p76
      %p79 = scmp.ne.s32.totalorder %s62, %s78
      %p80 = scmp.eq.s32.totalorder %s28, 0
      %p81 = por %p79, %p80
      %s82 = ssub.s32 %s22, %s29
      %p83 = scmp.eq.s32.totalorder %s82, 0
      %s85 = sadd.s32 %s84, 1
      %s86 = scalar_select %p83, %s84, %s85
      %p89 = pneg %p83
      %p90 = scmp.eq.s32.totalorder %s22, 1
      %p91 = por %p89, %p90
      %p92 = scmp.ne.s32.totalorder %s84, %s87
      %p93 = scmp.eq.s32.totalorder %s22, 0
      %p94 = por %p92, %p93
      %p95 = scmp.ne.s32.totalorder %s84, %s87
      %p96 = scmp.eq.s32.totalorder %s27, 1
      %p97 = por %p95, %p96
      %p98 = scmp.ne.s32.totalorder %s87, %s88
      %p99 = scmp.eq.s32.totalorder %s27, 0
      %p100 = por %p98, %p99
      %p101 = scmp.ne.s32.totalorder %s87, %s88
      %p102 = scmp.eq.s32.totalorder %s28, 1
      %p103 = por %p101, %p102
      %p105 = scmp.ne.s32.totalorder %s88, %s104
      %p106 = scmp.eq.s32.totalorder %s28, 0
      %p107 = por %p105, %p106
      %s109 = sadd.s32 %s108, 1
      %p112 = scmp.eq.s32.totalorder %s22, 1
      %p113 = scmp.ne.s32.totalorder %s108, %s110
      %p114 = scmp.eq.s32.totalorder %s22, 0
      %p115 = por %p113, %p114
      %p116 = scmp.ne.s32.totalorder %s108, %s110
      %p117 = scmp.eq.s32.totalorder %s27, 1
      %p118 = por %p116, %p117
      %p119 = scmp.ne.s32.totalorder %s110, %s111
      %p120 = scmp.eq.s32.totalorder %s27, 0
      %p121 = por %p119, %p120
      %p122 = scmp.ne.s32.totalorder %s110, %s111
      %p123 = scmp.eq.s32.totalorder %s28, 1
      %p124 = por %p122, %p123
      %p126 = scmp.ne.s32.totalorder %s111, %s125
      %p127 = scmp.eq.s32.totalorder %s28, 0
      %p128 = por %p126, %p127
      %s130 = sadd.s32 %s129, 1
      %p133 = scmp.eq.s32.totalorder %s22, 1
      %p134 = scmp.ne.s32.totalorder %s129, %s131
      %p135 = scmp.eq.s32.totalorder %s22, 0
      %p136 = por %p134, %p135
      %p137 = scmp.ne.s32.totalorder %s129, %s131
      %p138 = scmp.eq.s32.totalorder %s27, 1
      %p139 = por %p137, %p138
      %p140 = scmp.ne.s32.totalorder %s131, %s132
      %p141 = scmp.eq.s32.totalorder %s27, 0
      %p142 = por %p140, %p141
      %p143 = scmp.ne.s32.totalorder %s131, %s132
      %p144 = scmp.eq.s32.totalorder %s28, 1
      %p145 = por %p143, %p144
      %p147 = scmp.ne.s32.totalorder %s132, %s146
      %p148 = scmp.eq.s32.totalorder %s28, 0
      %p149 = por %p147, %p148
      %s151 = sadd.s32 %s150, 1
      %p154 = scmp.eq.s32.totalorder %s22, 1
      %p155 = scmp.ne.s32.totalorder %s150, %s152
      %p156 = scmp.eq.s32.totalorder %s22, 0
      %p157 = por %p155, %p156
      %p158 = scmp.ne.s32.totalorder %s150, %s152
      %p159 = scmp.eq.s32.totalorder %s27, 1
      %p160 = por %p158, %p159
      %p161 = scmp.ne.s32.totalorder %s152, %s153
      %p162 = scmp.eq.s32.totalorder %s27, 0
      %p163 = por %p161, %p162
      %p164 = scmp.ne.s32.totalorder %s152, %s153
      %p165 = scmp.eq.s32.totalorder %s28, 1
      %p166 = por %p164, %p165
      %p168 = scmp.ne.s32.totalorder %s153, %s167
      %p169 = scmp.eq.s32.totalorder %s28, 0
      %p170 = por %p168, %p169
      %s172 = sadd.s32 %s171, 1
      %p175 = scmp.eq.s32.totalorder %s22, 1
      %p176 = scmp.ne.s32.totalorder %s171, %s173
      %p177 = scmp.eq.s32.totalorder %s22, 0
      %p178 = por %p176, %p177
      %p179 = scmp.ne.s32.totalorder %s171, %s173
      %p180 = scmp.eq.s32.totalorder %s27, 1
      %p181 = por %p179, %p180
      %p182 = scmp.ne.s32.totalorder %s173, %s174
      %p183 = scmp.eq.s32.totalorder %s27, 0
      %p184 = por %p182, %p183
      %p185 = scmp.ne.s32.totalorder %s173, %s174
      %p186 = scmp.eq.s32.totalorder %s28, 1
      %p187 = por %p185, %p186
      %p189 = scmp.ne.s32.totalorder %s174, %s188
      %p190 = scmp.eq.s32.totalorder %s28, 0
      %p191 = por %p189, %p190
      %s193 = sadd.s32 %s192, 1
      %p196 = scmp.eq.s32.totalorder %s22, 1
      %p197 = scmp.ne.s32.totalorder %s192, %s194
      %p198 = scmp.eq.s32.totalorder %s22, 0
      %p199 = por %p197, %p198
      %p200 = scmp.ne.s32.totalorder %s192, %s194
      %p201 = scmp.eq.s32.totalorder %s27, 1
      %p202 = por %p200, %p201
      %p203 = scmp.ne.s32.totalorder %s194, %s195
      %p204 = scmp.eq.s32.totalorder %s27, 0
      %p205 = por %p203, %p204
      %p206 = scmp.ne.s32.totalorder %s194, %s195
      %p207 = scmp.eq.s32.totalorder %s28, 1
      %p208 = por %p206, %p207
      %p210 = scmp.ne.s32.totalorder %s195, %s209
      %p211 = scmp.eq.s32.totalorder %s28, 0
      %p212 = por %p210, %p211
      %s213 = ssub.s32 %s22, %s29
      %p214 = scmp.eq.s32.totalorder %s213, 0
      %s216 = sadd.s32 %s215, 1
      %s217 = scalar_select %p214, %s215, %s216
      %p220 = pneg %p214
      %p221 = scmp.eq.s32.totalorder %s22, 1
      %p222 = por %p220, %p221
      %p223 = scmp.ne.s32.totalorder %s215, %s218
      %p224 = scmp.eq.s32.totalorder %s22, 0
      %p225 = por %p223, %p224
      %p226 = scmp.ne.s32.totalorder %s215, %s218
      %p227 = scmp.eq.s32.totalorder %s27, 1
      %p228 = por %p226, %p227
      %p229 = scmp.ne.s32.totalorder %s218, %s219
      %p230 = scmp.eq.s32.totalorder %s27, 0
      %p231 = por %p229, %p230
      %p232 = scmp.ne.s32.totalorder %s218, %s219
      %p233 = scmp.eq.s32.totalorder %s28, 1
      %p234 = por %p232, %p233
      %p236 = scmp.ne.s32.totalorder %s219, %s235
      %p237 = scmp.eq.s32.totalorder %s28, 0
      %p238 = por %p236, %p237
      %p239 = scmp.le.s32.totalorder 1, %s22
      %p240 = scmp.lt.s32.totalorder %s22, 3
      %p241 = pnand %p239, %p240
      %p242 = pneg %p241
      // Predicated region
      $region9: #{tpu_custom_call.1} parent=5 // pred_check
        _
      $region10: #{tpu_custom_call.1} parent=5 // pred_check_branch
        %244 = sbr.rel (%p241) target = $region12
      $region11: #{tpu_custom_call.1} parent=5 // pred_region
        %s245 = ssub.s32 %s22, 1
        // Predicated region
        $region13: #{tpu_custom_call.1} parent=11 // pred_check
          %p246 = pneg %p121
        $region14: #{tpu_custom_call.1} parent=11 // pred_check_branch
          %248 = sbr.rel (%p246) target = $region16
        $region15: #{tpu_custom_call.1} parent=11 // pred_region
          _
        $region16: #{tpu_custom_call.1} parent=11 // pred_fallthru
          _
        // Predicated region
        $region17: #{tpu_custom_call.1} parent=11 // pred_check
          %p249 = pneg %p142
        $region18: #{tpu_custom_call.1} parent=11 // pred_check_branch
          %251 = sbr.rel (%p249) target = $region20
        $region19: #{tpu_custom_call.1} parent=11 // pred_region
          %s253 = ssub.s32 1024, 1024
          %254 = vsyncadd [#allocation7], %s253
          %s255 = sshll.u32 [#allocation6], 4
          %s256 = int_to_ptr.vmem [resolvable:$true] %s255
          %261 = dma.hbm_to_vmem [thread:$0]  %s4, 1024, %s256, [#allocation7], 64, 64, 4
        $region20: #{tpu_custom_call.1} parent=11 // pred_fallthru
          _
        // Predicated region
        $region21: #{tpu_custom_call.1} parent=11 // pred_check
          %p262 = pneg %p163
        $region22: #{tpu_custom_call.1} parent=11 // pred_check_branch
          %264 = sbr.rel (%p262) target = $region24
        $region23: #{tpu_custom_call.1} parent=11 // pred_region
          %s266 = ssub.s32 1024, 1024
          %267 = vsyncadd [#allocation7], %s266
          %s268 = sshll.u32 [#allocation8], 4
          %s269 = int_to_ptr.vmem [resolvable:$true] %s268
          %274 = dma.hbm_to_vmem [thread:$0]  %s5, 1024, %s269, [#allocation7], 64, 64, 4
        $region24: #{tpu_custom_call.1} parent=11 // pred_fallthru
          _
        // Predicated region
        $region25: #{tpu_custom_call.1} parent=11 // pred_check
          %p275 = pneg %p184
        $region26: #{tpu_custom_call.1} parent=11 // pred_check_branch
          %277 = sbr.rel (%p275) target = $region28
        $region27: #{tpu_custom_call.1} parent=11 // pred_region
          %s279 = ssub.s32 1024, 1024
          %280 = vsyncadd [#allocation10], %s279
          %s281 = sshll.u32 [#allocation9], 4
          %s282 = int_to_ptr.vmem [resolvable:$true] %s281
          %287 = dma.hbm_to_vmem [thread:$0]  %s6, 1024, %s282, [#allocation10], 64, 64, 4
        $region28: #{tpu_custom_call.1} parent=11 // pred_fallthru
          _
        // Predicated region
        $region29: #{tpu_custom_call.1} parent=11 // pred_check
          %p288 = pneg %p205
        $region30: #{tpu_custom_call.1} parent=11 // pred_check_branch
          %290 = sbr.rel (%p288) target = $region32
        $region31: #{tpu_custom_call.1} parent=11 // pred_region
          _
        $region32: #{tpu_custom_call.1} parent=11 // pred_fallthru
          _
      $region12: #{tpu_custom_call.1} parent=5 // pred_fallthru
        _
      %p291 = scmp.lt.s32.totalorder %s22, 2
      // Predicated region
      $region33: #{tpu_custom_call.1} parent=5 // pred_check
        %p292 = pneg %p291
      $region34: #{tpu_custom_call.1} parent=5 // pred_check_branch
        %294 = sbr.rel (%p292) target = $region36
      $region35: #{tpu_custom_call.1} parent=5 // pred_region
        // Predicated region
        $region37: #{tpu_custom_call.1} parent=35 // pred_check
          %p295 = pneg %p42
        $region38: #{tpu_custom_call.1} parent=35 // pred_check_branch
          %297 = sbr.rel (%p295) target = $region40
        $region39: #{tpu_custom_call.1} parent=35 // pred_region
          %s298 = smul.u32 2, %s22
          %p299 = scmp.lt.s32.totalorder %s298, 3
          %s300 = scalar_select %p299, %s298, 3
          %s301 = smul.addr %s300, 8
          %s302 = scalar_lea.vmem %s0, %s301
          %s303 = smul.u32 2, %s22
        $region40: #{tpu_custom_call.1} parent=35 // pred_fallthru
          _
        // Predicated region
        $region41: #{tpu_custom_call.1} parent=35 // pred_check
          %p304 = pneg %p68
        $region42: #{tpu_custom_call.1} parent=35 // pred_check_branch
          %306 = sbr.rel (%p304) target = $region44
        $region43: #{tpu_custom_call.1} parent=35 // pred_region
          %s307 = smul.u32 2, %s22
          %p308 = scmp.lt.s32.totalorder %s307, 3
          %s309 = scalar_select %p308, %s307, 3
          %s310 = smul.addr %s309, 8
          %s311 = scalar_lea.vmem %s1, %s310
          %s312 = smul.u32 2, %s22
        $region44: #{tpu_custom_call.1} parent=35 // pred_fallthru
          _
        // Predicated region
        $region45: #{tpu_custom_call.1} parent=35 // pred_check
          %p313 = pneg %p94
        $region46: #{tpu_custom_call.1} parent=35 // pred_check_branch
          %315 = sbr.rel (%p313) target = $region48
        $region47: #{tpu_custom_call.1} parent=35 // pred_region
          %s316 = sand.u32 %s84, 1
          %s317 = scalar_lea.sflag [#allocation4], %s316
          %s318 = sand.u32 %s84, 1
          %s319 = smul.addr %s318, 8
          %s320 = scalar_lea.vmem [#allocation3], %s319
          %s321 = smul.u32 2, %s22
          %s323 = ssub.s32 128, 128
          %324 = vsyncadd %s317, %s323
          %s325 = smul.addr %s321, 64
          %s326 = scalar_lea.hbm %s2, %s325
          %s327 = sshll.u32 %s320, 4
          %s328 = int_to_ptr.vmem [resolvable:$true] %s327
          %333 = dma.hbm_to_vmem [thread:$0]  %s326, 128, %s328, %s317, 64, 64, 4
        $region48: #{tpu_custom_call.1} parent=35 // pred_fallthru
          _
      $region36: #{tpu_custom_call.1} parent=5 // pred_fallthru
        _
      %p334 = scmp.le.s32.totalorder 1, %s22
      %p335 = scmp.lt.s32.totalorder %s22, 3
      %p336 = pnand %p334, %p335
      %p337 = pneg %p336
      // Predicated region
      $region49: #{tpu_custom_call.1} parent=5 // pred_check
        _
      $region50: #{tpu_custom_call.1} parent=5 // pred_check_branch
        %339 = sbr.rel (%p336) target = $region52
      $region51: #{tpu_custom_call.1} parent=5 // pred_region
        %s340 = ssub.s32 %s22, 1
        %s341 = sand.u32 %s87, 1
        %s342 = scalar_lea.sflag [#allocation4], %s341
        %s343 = sand.u32 %s87, 1
        %s344 = smul.addr %s343, 8
        %s345 = scalar_lea.vmem [#allocation3], %s344
        // Predicated region
        $region53: #{tpu_custom_call.1} parent=51 // pred_check
          %p346 = pneg %p100
        $region54: #{tpu_custom_call.1} parent=51 // pred_check_branch
          %348 = sbr.rel (%p346) target = $region56
        $region55: #{tpu_custom_call.1} parent=51 // pred_region
          %349 = dma.done %s342, 128
        $region56: #{tpu_custom_call.1} parent=51 // pred_fallthru
          _
        // Predicated region
        $region57: #{tpu_custom_call.1} parent=51 // pred_check
          %p350 = pneg %p142
        $region58: #{tpu_custom_call.1} parent=51 // pred_check_branch
          %352 = sbr.rel (%p350) target = $region60
        $region59: #{tpu_custom_call.1} parent=51 // pred_region
          %353 = dma.done [#allocation7], 1024
        $region60: #{tpu_custom_call.1} parent=51 // pred_fallthru
          _
        // Predicated region
        $region61: #{tpu_custom_call.1} parent=51 // pred_check
          %p354 = pneg %p163
        $region62: #{tpu_custom_call.1} parent=51 // pred_check_branch
          %356 = sbr.rel (%p354) target = $region64
        $region63: #{tpu_custom_call.1} parent=51 // pred_region
          %357 = dma.done [#allocation7], 1024
        $region64: #{tpu_custom_call.1} parent=51 // pred_fallthru
          _
        // Predicated region
        $region65: #{tpu_custom_call.1} parent=51 // pred_check
          %p358 = pneg %p184
        $region66: #{tpu_custom_call.1} parent=51 // pred_check_branch
          %360 = sbr.rel (%p358) target = $region68
        $region67: #{tpu_custom_call.1} parent=51 // pred_region
          %361 = dma.done [#allocation10], 1024
        $region68: #{tpu_custom_call.1} parent=51 // pred_fallthru
          _
        %s362 = smul.u32 2, %s27
        %p363 = scmp.lt.s32.totalorder %s362, 3
        %s364 = scalar_select %p363, %s362, 3
        %s365 = smul.addr %s364, 8
        %s366 = scalar_lea.vmem %s0, %s365
        %p367 = pneg %p48
        %p368 = pneg %p45
        %s369 = smul.u32 2, %s27
        %p370 = scmp.lt.s32.totalorder %s369, 3
        %s371 = scalar_select %p370, %s369, 3
        %s372 = smul.addr %s371, 8
        %s373 = scalar_lea.vmem %s1, %s372
        %p374 = pneg %p74
        %p375 = pneg %p71
        %s376 = sand.u32 %s87, 1
        %s377 = scalar_lea.sflag [#allocation4], %s376
        %s378 = sand.u32 %s87, 1
        %s379 = smul.addr %s378, 8
        %s380 = scalar_lea.vmem [#allocation3], %s379
        %p381 = pneg %p100
        %p382 = pneg %p97
        %p383 = pneg %p121
        %p384 = pneg %p118
        %p385 = pneg %p142
        %p386 = pneg %p139
        %p387 = pneg %p163
        %p388 = pneg %p160
        %p389 = pneg %p184
        %p390 = pneg %p181
        %p391 = pneg %p205
        %p392 = pneg %p202
        %p393 = pneg %p231
        %p394 = pneg %p228
        %s395 = sand.u32 %s218, 1
        %s396 = scalar_lea.sflag [#allocation5], %s395
        %s397 = sand.u32 %s218, 1
        %s398 = smul.addr %s397, 16
        %s399 = scalar_lea.vmem [#allocation11], %s398
        %s400 = smul.u32 2, %s27
        %p401 = scmp.lt.s32.totalorder %s400, 3
        %s402 = scalar_select %p401, %s400, 3
        %s403 = smul.addr %s402, 8
        %s404 = scalar_lea.vmem %s0, %s403
        %s405 = smul.u32 2, %s27
        %s406 = smul.u32 2, %s27
        %p407 = scmp.lt.s32.totalorder %s406, 3
        %s408 = scalar_select %p407, %s406, 3
        %s409 = smul.addr %s408, 8
        %s410 = scalar_lea.vmem %s1, %s409
        %s411 = smul.u32 2, %s27
        %s412 = smul.u32 2, %s27
        %s413 = smul.u32 2, %s27
        %v415 = vld [vmem:[%s345] sm:$0xf]
        %v416 = vld [vmem:[%s345 + $0x4] sm:$0xf]
        %v417 = vld [vmem:[#allocation8] sm:$0xf]
        %v418 = vld [vmem:[#allocation8 + $0x4] sm:$0xf]
        %v419 = vld [vmem:[#allocation8 + $0x8] sm:$0xf]
        %v420 = vld [vmem:[#allocation8 + $0xc] sm:$0xf]
        %v421 = vld [vmem:[#allocation8 + $0x10] sm:$0xf]
        %v422 = vld [vmem:[#allocation8 + $0x14] sm:$0xf]
        %v423 = vld [vmem:[#allocation8 + $0x18] sm:$0xf]
        %v424 = vld [vmem:[#allocation8 + $0x1c] sm:$0xf]
        %v425 = vld [vmem:[#allocation8 + $0x20] sm:$0xf]
        %v426 = vld [vmem:[#allocation8 + $0x24] sm:$0xf]
        %v427 = vld [vmem:[#allocation8 + $0x28] sm:$0xf]
        %v428 = vld [vmem:[#allocation8 + $0x2c] sm:$0xf]
        %v429 = vld [vmem:[#allocation8 + $0x30] sm:$0xf]
        %v430 = vld [vmem:[#allocation8 + $0x34] sm:$0xf]
        %v431 = vld [vmem:[#allocation8 + $0x38] sm:$0xf]
        %v432 = vld [vmem:[#allocation8 + $0x3c] sm:$0xf]
        %v435 = vunpack.c.l.b16 %v415
        %v436 = vunpack.c.l.b16 %v416
        %v437 = vpack.c.b16 %v436, %v435
        %v455 = vunpack.c.l.b16 %v417
        %v456 = vunpack.c.l.b16 %v418
        %v457 = vunpack.c.l.b16 %v419
        %v458 = vunpack.c.l.b16 %v420
        %v459 = vunpack.c.l.b16 %v421
        %v460 = vunpack.c.l.b16 %v422
        %v461 = vunpack.c.l.b16 %v423
        %v462 = vunpack.c.l.b16 %v424
        %v463 = vunpack.c.l.b16 %v425
        %v464 = vunpack.c.l.b16 %v426
        %v465 = vunpack.c.l.b16 %v427
        %v466 = vunpack.c.l.b16 %v428
        %v467 = vunpack.c.l.b16 %v429
        %v468 = vunpack.c.l.b16 %v430
        %v469 = vunpack.c.l.b16 %v431
        %v470 = vunpack.c.l.b16 %v432
        %v471 = vpack.c.b16 %v456, %v455
        %v472 = vpack.c.b16 %v458, %v457
        %v473 = vpack.c.b16 %v460, %v459
        %v474 = vpack.c.b16 %v462, %v461
        %v475 = vpack.c.b16 %v464, %v463
        %v476 = vpack.c.b16 %v466, %v465
        %v477 = vpack.c.b16 %v468, %v467
        %v478 = vpack.c.b16 %v470, %v469
        %487 = vmatprep.subr.bf16.mxu0 0
        %488 = vmatpush1.bf16.msra.mxu0 %v471
        %489 = vmatprep.subr.bf16.mxu0 0
        %490 = vmatpush1.bf16.msra.mxu0 %v472
        %491 = vmatprep.subr.bf16.mxu0 0
        %492 = vmatpush1.bf16.msra.mxu0 %v473
        %493 = vmatprep.subr.bf16.mxu0 0
        %494 = vmatpush1.bf16.msra.mxu0 %v474
        %495 = vmatprep.subr.bf16.mxu0 0
        %496 = vmatpush1.bf16.msra.mxu0 %v475
        %497 = vmatprep.subr.bf16.mxu0 0
        %498 = vmatpush1.bf16.msra.mxu0 %v476
        %499 = vmatprep.subr.bf16.mxu0 0
        %500 = vmatpush1.bf16.msra.mxu0 %v477
        %501 = vmatprep.subr.bf16.mxu0 0
        %502 = vmatpush1.bf16.msra.mxu0 %v478
        %503 = vmatprep.subr.bf16.mxu0 0
        %504 = vmatpush1.bf16.msra.mxu0 0
        %505 = vmatprep.subr.bf16.mxu0 0
        %506 = vmatpush1.bf16.msra.mxu0 0
        %507 = vmatprep.subr.bf16.mxu0 0
        %508 = vmatpush1.bf16.msra.mxu0 0
        %509 = vmatprep.subr.bf16.mxu0 0
        %510 = vmatpush1.bf16.msra.mxu0 0
        %511 = vmatprep.subr.bf16.mxu0 0
        %512 = vmatpush1.bf16.msra.mxu0 0
        %513 = vmatprep.subr.bf16.mxu0 0
        %514 = vmatpush1.bf16.msra.mxu0 0
        %515 = vmatprep.subr.bf16.mxu0 0
        %516 = vmatpush1.bf16.msra.mxu0 0
        %517 = vmatprep.subr.bf16.mxu0 0
        %518 = vmatpush1.bf16.msra.mxu0 0
        %519 = vmatprep.mubr.bf16.mxu0 0
        %520 = vmatmul.mubr.bf16.gmra.mrb[0].mxu0 %v437
        %v521 = vpop.f32.mrb[0].mxu0
        %v522 = vadd.f32 0.0, %v521
        %v523 = vpop.f32.mrb[0].mxu0
        %v524 = vpop.f32.mrb[0].mxu0
        %v525 = vadd.f32 0.0, %v524
        %v526 = vpop.f32.mrb[0].mxu0
        %527 = vdwg.mxu0
        %528 = vst [vmem:[#allocation2] sm:$0xff] %v522
        %529 = vst [vmem:[#allocation2 + $0x8] sm:$0xff] %v525
        %v530 = vld [vmem:[%s404] sm:$0xff]
        %v531 = vld [vmem:[%s404 + $0x8] sm:$0xff]
        loop: start=0, step=1, limit=4
        $region69: #{tpu_custom_call.1} parent=51 // loop_pre_header
          _
        $region70: #{tpu_custom_call.1} parent=51 // loop_header
          %s533 = sphi 0, %s537
          %p534 = scmp.ge.s32.totalorder %s533, 4
          %v538 = vphi %v530, %v789
          %v539 = vphi %v531, %v790
        $region71: #{tpu_custom_call.1} parent=51 // loop_header_branch
          %536 = sbr.rel (%p534) target = $region75
        $region72: #{tpu_custom_call.1} parent=51 // loop_body
          %s540 = scalar_lea.vmem %s3, %s533
          %v541 = vld [vmem:[%s540] sm:$0x1]
          %v542 = vpack.c.bf16 %v539, %v538
          %v543 = vld [vmem:[#allocation6] sm:$0xf]
          %v544 = vld [vmem:[#allocation6 + $0x4] sm:$0xf]
          %v545 = vld [vmem:[#allocation6 + $0x8] sm:$0xf]
          %v546 = vld [vmem:[#allocation6 + $0xc] sm:$0xf]
          %v547 = vld [vmem:[#allocation6 + $0x10] sm:$0xf]
          %v548 = vld [vmem:[#allocation6 + $0x14] sm:$0xf]
          %v549 = vld [vmem:[#allocation6 + $0x18] sm:$0xf]
          %v550 = vld [vmem:[#allocation6 + $0x1c] sm:$0xf]
          %v551 = vld [vmem:[#allocation6 + $0x20] sm:$0xf]
          %v552 = vld [vmem:[#allocation6 + $0x24] sm:$0xf]
          %v553 = vld [vmem:[#allocation6 + $0x28] sm:$0xf]
          %v554 = vld [vmem:[#allocation6 + $0x2c] sm:$0xf]
          %v555 = vld [vmem:[#allocation6 + $0x30] sm:$0xf]
          %v556 = vld [vmem:[#allocation6 + $0x34] sm:$0xf]
          %v557 = vld [vmem:[#allocation6 + $0x38] sm:$0xf]
          %v558 = vld [vmem:[#allocation6 + $0x3c] sm:$0xf]
          %v559 = vld [vmem:[#allocation2] sm:$0xff]
          %v560 = vld [vmem:[#allocation2 + $0x8] sm:$0xff]
          %v577 = vunpack.c.l.b16 %v543
          %v578 = vunpack.c.l.b16 %v544
          %v579 = vunpack.c.l.b16 %v545
          %v580 = vunpack.c.l.b16 %v546
          %v581 = vunpack.c.l.b16 %v547
          %v582 = vunpack.c.l.b16 %v548
          %v583 = vunpack.c.l.b16 %v549
          %v584 = vunpack.c.l.b16 %v550
          %v585 = vunpack.c.l.b16 %v551
          %v586 = vunpack.c.l.b16 %v552
          %v587 = vunpack.c.l.b16 %v553
          %v588 = vunpack.c.l.b16 %v554
          %v589 = vunpack.c.l.b16 %v555
          %v590 = vunpack.c.l.b16 %v556
          %v591 = vunpack.c.l.b16 %v557
          %v592 = vunpack.c.l.b16 %v558
          %v593 = vpack.c.b16 %v578, %v577
          %v594 = vpack.c.b16 %v580, %v579
          %v595 = vpack.c.b16 %v582, %v581
          %v596 = vpack.c.b16 %v584, %v583
          %v597 = vpack.c.b16 %v586, %v585
          %v598 = vpack.c.b16 %v588, %v587
          %v599 = vpack.c.b16 %v590, %v589
          %v600 = vpack.c.b16 %v592, %v591
          %609 = vmatprep.subr.bf16.mxu0 0
          %610 = vmatpush1.bf16.msra.mxu0 %v593
          %611 = vmatprep.subr.bf16.mxu0 0
          %612 = vmatpush1.bf16.msra.mxu0 %v594
          %613 = vmatprep.subr.bf16.mxu0 0
          %614 = vmatpush1.bf16.msra.mxu0 %v595
          %615 = vmatprep.subr.bf16.mxu0 0
          %616 = vmatpush1.bf16.msra.mxu0 %v596
          %617 = vmatprep.subr.bf16.mxu0 0
          %618 = vmatpush1.bf16.msra.mxu0 %v597
          %619 = vmatprep.subr.bf16.mxu0 0
          %620 = vmatpush1.bf16.msra.mxu0 %v598
          %621 = vmatprep.subr.bf16.mxu0 0
          %622 = vmatpush1.bf16.msra.mxu0 %v599
          %623 = vmatprep.subr.bf16.mxu0 0
          %624 = vmatpush1.bf16.msra.mxu0 %v600
          %625 = vmatprep.subr.bf16.mxu0 0
          %626 = vmatpush1.bf16.msra.mxu0 0
          %627 = vmatprep.subr.bf16.mxu0 0
          %628 = vmatpush1.bf16.msra.mxu0 0
          %629 = vmatprep.subr.bf16.mxu0 0
          %630 = vmatpush1.bf16.msra.mxu0 0
          %631 = vmatprep.subr.bf16.mxu0 0
          %632 = vmatpush1.bf16.msra.mxu0 0
          %633 = vmatprep.subr.bf16.mxu0 0
          %634 = vmatpush1.bf16.msra.mxu0 0
          %635 = vmatprep.subr.bf16.mxu0 0
          %636 = vmatpush1.bf16.msra.mxu0 0
          %637 = vmatprep.subr.bf16.mxu0 0
          %638 = vmatpush1.bf16.msra.mxu0 0
          %639 = vmatprep.subr.bf16.mxu0 0
          %640 = vmatpush1.bf16.msra.mxu0 0
          %641 = vmatprep.mubr.bf16.mxu0 0
          %642 = vmatmul.mubr.bf16.gmra.mrb[0].mxu0 %v542
          %v643 = vpop.f32.mrb[0].mxu0
          %v644 = vadd.f32 %v559, %v643
          %v645 = vpop.f32.mrb[0].mxu0
          %v646 = vpop.f32.mrb[0].mxu0
          %v647 = vadd.f32 %v560, %v646
          %v648 = vpop.f32.mrb[0].mxu0
          %649 = vdwg.mxu0
          %v650 = vlaneseq
          %v651 = vshrl.u32 %v650, 7
          %v652 = vsub.s32 0, %v651
          %v653 = vrot.slane %v541, %v652
          %v654 = vadd.f32 %v644, %v653
          %v655 = vadd.f32 %v647, %v653
          %v656 = vtanh.pop %v654
          %v657 = vtanh.pop %v655
          %v658 = vpack.c.bf16 %v657, %v656
          %v659 = vld [vmem:[#allocation9] sm:$0xf]
          %v660 = vld [vmem:[#allocation9 + $0x4] sm:$0xf]
          %v661 = vld [vmem:[#allocation9 + $0x8] sm:$0xf]
          %v662 = vld [vmem:[#allocation9 + $0xc] sm:$0xf]
          %v663 = vld [vmem:[#allocation9 + $0x10] sm:$0xf]
          %v664 = vld [vmem:[#allocation9 + $0x14] sm:$0xf]
          %v665 = vld [vmem:[#allocation9 + $0x18] sm:$0xf]
          %v666 = vld [vmem:[#allocation9 + $0x1c] sm:$0xf]
          %v667 = vld [vmem:[#allocation9 + $0x20] sm:$0xf]
          %v668 = vld [vmem:[#allocation9 + $0x24] sm:$0xf]
          %v669 = vld [vmem:[#allocation9 + $0x28] sm:$0xf]
          %v670 = vld [vmem:[#allocation9 + $0x2c] sm:$0xf]
          %v671 = vld [vmem:[#allocation9 + $0x30] sm:$0xf]
          %v672 = vld [vmem:[#allocation9 + $0x34] sm:$0xf]
          %v673 = vld [vmem:[#allocation9 + $0x38] sm:$0xf]
          %v674 = vld [vmem:[#allocation9 + $0x3c] sm:$0xf]
          %v675 = vld [vmem:[%s7] sm:$0x1]
          %v677 = vlaneseq
          %v678 = vshrl.u32 %v677, 7
          %v679 = vsub.s32 0, %v678
          %v680 = vrot.slane %v675, %v679
          %v698 = vunpack.c.l.b16 %v659
          %v699 = vunpack.c.l.b16 %v660
          %v700 = vunpack.c.l.b16 %v661
          %v701 = vunpack.c.l.b16 %v662
          %v702 = vunpack.c.l.b16 %v663
          %v703 = vunpack.c.l.b16 %v664
          %v704 = vunpack.c.l.b16 %v665
          %v705 = vunpack.c.l.b16 %v666
          %v706 = vunpack.c.l.b16 %v667
          %v707 = vunpack.c.l.b16 %v668
          %v708 = vunpack.c.l.b16 %v669
          %v709 = vunpack.c.l.b16 %v670
          %v710 = vunpack.c.l.b16 %v671
          %v711 = vunpack.c.l.b16 %v672
          %v712 = vunpack.c.l.b16 %v673
          %v713 = vunpack.c.l.b16 %v674
          %v714 = vpack.c.b16 %v699, %v698
          %v715 = vpack.c.b16 %v701, %v700
          %v716 = vpack.c.b16 %v703, %v702
          %v717 = vpack.c.b16 %v705, %v704
          %v718 = vpack.c.b16 %v707, %v706
          %v719 = vpack.c.b16 %v709, %v708
          %v720 = vpack.c.b16 %v711, %v710
          %v721 = vpack.c.b16 %v713, %v712
          %730 = vmatprep.subr.bf16.mxu0 0
          %731 = vmatpush1.bf16.msra.mxu0 %v714
          %732 = vmatprep.subr.bf16.mxu0 0
          %733 = vmatpush1.bf16.msra.mxu0 %v715
          %734 = vmatprep.subr.bf16.mxu0 0
          %735 = vmatpush1.bf16.msra.mxu0 %v716
          %736 = vmatprep.subr.bf16.mxu0 0
          %737 = vmatpush1.bf16.msra.mxu0 %v717
          %738 = vmatprep.subr.bf16.mxu0 0
          %739 = vmatpush1.bf16.msra.mxu0 %v718
          %740 = vmatprep.subr.bf16.mxu0 0
          %741 = vmatpush1.bf16.msra.mxu0 %v719
          %742 = vmatprep.subr.bf16.mxu0 0
          %743 = vmatpush1.bf16.msra.mxu0 %v720
          %744 = vmatprep.subr.bf16.mxu0 0
          %745 = vmatpush1.bf16.msra.mxu0 %v721
          %746 = vmatprep.subr.bf16.mxu0 0
          %747 = vmatpush1.bf16.msra.mxu0 0
          %748 = vmatprep.subr.bf16.mxu0 0
          %749 = vmatpush1.bf16.msra.mxu0 0
          %750 = vmatprep.subr.bf16.mxu0 0
          %751 = vmatpush1.bf16.msra.mxu0 0
          %752 = vmatprep.subr.bf16.mxu0 0
          %753 = vmatpush1.bf16.msra.mxu0 0
          %754 = vmatprep.subr.bf16.mxu0 0
          %755 = vmatpush1.bf16.msra.mxu0 0
          %756 = vmatprep.subr.bf16.mxu0 0
          %757 = vmatpush1.bf16.msra.mxu0 0
          %758 = vmatprep.subr.bf16.mxu0 0
          %759 = vmatpush1.bf16.msra.mxu0 0
          %760 = vmatprep.subr.bf16.mxu0 0
          %761 = vmatpush1.bf16.msra.mxu0 0
          %762 = vmatprep.mubr.bf16.mxu0 0
          %763 = vmatmul.mubr.bf16.gmra.mrb[0].mxu0 %v658
          %v764 = vpop.f32.mrb[0].mxu0
          %v765 = vadd.f32 %v680, %v764
          %v766 = vpop.f32.mrb[0].mxu0
          %v767 = vpop.f32.mrb[0].mxu0
          %v768 = vadd.f32 %v680, %v767
          %v769 = vpop.f32.mrb[0].mxu0
          %770 = vdwg.mxu0
          %v771 = vld [vmem:[%s410] sm:$0xff]
          %v772 = vld [vmem:[%s410 + $0x8] sm:$0xff]
          %774 = vset.pattern.permute.xlu0 0
          %775 = vperm.xlu0 %774, %v771
          %v776 = vpop.permute.xlu0 %775
          %779 = vset.pattern.permute.xlu0 0
          %780 = vperm.xlu0 %779, %v772
          %v781 = vpop.permute.xlu0 %780
          %v783 = vmul.f32 %v765, %v776
          %v784 = vmul.f32 %v768, %v781
          %v785 = vmul.f32 %v538, 0.92388254
          %v786 = vmul.f32 %v539, 0.92388254
          %v787 = vmul.f32 %v783, 0.38267618
          %v788 = vmul.f32 %v784, 0.38267618
          %v789 = vsub.f32 %v785, %v787
          %v790 = vsub.f32 %v786, %v788
        $region73: #{tpu_custom_call.1} parent=51 // loop_footer
          %s537 = sadd.s32 1, %s533
        $region74: #{tpu_custom_call.1} parent=51 // loop_footer_branch
          %532 = sbr.rel target = $region70
        $region75: #{tpu_custom_call.1} parent=51 // loop_exit
          _
        %791 = vst [vmem:[%s399] sm:$0xff] %v538
        %792 = vst [vmem:[%s399 + $0x8] sm:$0xff] %v539
        %s793 = sand.u32 %s218, 1
        %s794 = scalar_lea.sflag [#allocation5], %s793
        %s795 = sand.u32 %s218, 1
        %s796 = smul.addr %s795, 16
        %s797 = scalar_lea.vmem [#allocation11], %s796
        // Predicated region
        $region76: #{tpu_custom_call.1} parent=51 // pred_check
          %p798 = pneg %p228
        $region77: #{tpu_custom_call.1} parent=51 // pred_check_branch
          %800 = sbr.rel (%p798) target = $region79
        $region78: #{tpu_custom_call.1} parent=51 // pred_region
          %s801 = smul.u32 2, %s27
          %s803 = ssub.s32 256, 256
          %804 = vsyncadd %s794, %s803
          %s805 = smul.addr %s801, 128
          %s806 = scalar_lea.hbm %s8, %s805
          %s807 = sshll.u32 %s797, 4
          %s808 = int_to_ptr.vmem [resolvable:$true] %s807
          %813 = dma.vmem_to_hbm [thread:$0]  %s808, 256, %s806, %s794, 128, 128, 8
        $region79: #{tpu_custom_call.1} parent=51 // pred_fallthru
          _
      $region52: #{tpu_custom_call.1} parent=5 // pred_fallthru
        _
      %p814 = scmp.le.s32.totalorder 2, %s22
      // Predicated region
      $region80: #{tpu_custom_call.1} parent=5 // pred_check
        %p815 = pneg %p814
      $region81: #{tpu_custom_call.1} parent=5 // pred_check_branch
        %817 = sbr.rel (%p815) target = $region83
      $region82: #{tpu_custom_call.1} parent=5 // pred_region
        %s818 = ssub.s32 %s22, 2
        // Predicated region
        $region84: #{tpu_custom_call.1} parent=82 // pred_check
          %p819 = pneg %p234
        $region85: #{tpu_custom_call.1} parent=82 // pred_check_branch
          %821 = sbr.rel (%p819) target = $region87
        $region86: #{tpu_custom_call.1} parent=82 // pred_region
          %s822 = sand.u32 %s219, 1
          %s823 = scalar_lea.sflag [#allocation5], %s822
          %s824 = sand.u32 %s219, 1
          %s825 = smul.addr %s824, 16
          %s826 = scalar_lea.vmem [#allocation11], %s825
          %827 = dma.done %s823, 256
        $region87: #{tpu_custom_call.1} parent=82 // pred_fallthru
          _
      $region83: #{tpu_custom_call.1} parent=5 // pred_fallthru
        _
    $region6: #{tpu_custom_call.1} parent=1 // loop_footer
      %s26 = sadd.s32 1, %s22
    $region7: #{tpu_custom_call.1} parent=1 // loop_footer_branch
      %21 = sbr.rel target = $region3
    $region8: #{tpu_custom_call.1} parent=1 // loop_exit
      _
    %828 = vsyncpa [#allocation4], 1
    %s829 = scalar_lea.sflag [#allocation4], 1
    %830 = vsyncpa %s829, 1
    %831 = vsyncpa [#allocation7], 1
    %832 = vsyncpa [#allocation10], 1
    %833 = vsyncpa [#allocation5], 1
    %s834 = scalar_lea.sflag [#allocation5], 1
    %835 = vsyncpa %s834, 1

</llo_original>
